<compile_context>
chip_gen: v5e
topology: v5e:2x2
jax: 0.10.0
libtpu: 0.0.40
codegen_flags: <defaults>
</compile_context>

<pallas_src>
import jax
import jax.numpy as jnp
from jax.experimental import pallas as pl
from jax.experimental.pallas import tpu as pltpu

HIDDEN = 64       # self.hidden_size = 64
OBS_DIM = 4       # CartPole-like observation_space.shape[0]
N_ACTIONS = 2     # CartPole-like action_space.n (kernel specialized to 2 actions)

OBS_PAD = 8       # obs dim padded to the sublane granule
LANE = 128        # lane granule: batch tiles are multiples of 128 columns
TB_MAX = 1024     # max batch-tile width (columns per grid step)


def actor_sample_kernel(u_ref,                  # (1, TB)       f32 uniforms in [0,1)
                        x_ref,                  # (OBS_PAD, TB) f32 transposed obs
                        w1_ref, b1_ref,         # (H, OBS_PAD) f32, (H, 1) f32
                        w2_ref, b2_ref,         # (H, H) f32,       (H, 1) f32
                        wd_ref, bd_ref,         # (8, H) f32 (row0 = w3[:,1]-w3[:,0]), (1,1) f32
                        action_ref, logp_ref):  # (1, TB) i32, (1, TB) f32
    # Transposed MLP: hidden on sublanes, batch on lanes -> everything below is
    # lane-dense (full 128-lane vregs).
    h1 = jnp.dot(w1_ref[...], x_ref[...], preferred_element_type=jnp.float32) + b1_ref[...]
    h1 = jnp.maximum(h1, 0.0)                                                  # (H, TB)
    h2 = jnp.dot(w2_ref[...], h1, preferred_element_type=jnp.float32) + b2_ref[...]
    h2 = jnp.maximum(h2, 0.0)                                                  # (H, TB)

    # 2-action specialization: only the logit difference d = l1 - l0 is needed.
    d_rows = jnp.dot(wd_ref[...], h2, preferred_element_type=jnp.float32)      # (8, TB)
    d = d_rows[0:1, :] + bd_ref[...]                                           # (1, TB)

    # log P(a=1) = log sigmoid(d) = -softplus(-d);  log P(a=0) = log P(a=1) - d.
    # Stable softplus: sp(x) = max(x, 0) + log(1 + exp(-|x|)).
    e = jnp.exp(-jnp.abs(d))
    log1pe = jnp.log(1.0 + e)
    lp1 = -(jnp.maximum(-d, 0.0) + log1pe)
    lp0 = lp1 - d
    p1 = jnp.exp(lp1)                                                          # sigmoid(d)

    take1 = u_ref[...] < p1
    action_ref[...] = take1.astype(jnp.int32)
    logp_ref[...] = jnp.where(take1, lp1, lp0)


def _round_up(a, b):
    return ((a + b - 1) // b) * b


def _choose_tile(batch):
    """Batch-tile width: small batches pad only to 128; otherwise aim for >=2 tiles
    (so both v7x TensorCores get work) capped at TB_MAX."""
    b128 = _round_up(max(batch, 1), LANE)
    if b128 <= LANE:
        return LANE
    half = _round_up((b128 + 1) // 2, LANE)
    return min(TB_MAX, half)


def prepare_params(params):
    """Pad/transpose the Linear params once into the kernel layout.

    Input layout: weights (in, out) f32 (i.e. torch weights transposed), biases (out,) f32.
    """
    w1, b1, w2, b2, w3, b3 = params
    w1t = jnp.zeros((HIDDEN, OBS_PAD), jnp.float32).at[:, :OBS_DIM].set(w1.T)
    b1c = b1.reshape(HIDDEN, 1).astype(jnp.float32)
    w2t = w2.T.astype(jnp.float32)
    b2c = b2.reshape(HIDDEN, 1).astype(jnp.float32)
    wd = jnp.zeros((8, HIDDEN), jnp.float32).at[0, :].set(w3[:, 1] - w3[:, 0])
    bd = (b3[1] - b3[0]).astype(jnp.float32).reshape(1, 1)
    return (w1t, b1c, w2t, b2c, wd, bd)


def actor_get_action(x, prepared, key):
    """(B, OBS_DIM) f32 observations -> (action int32 (B,), log_prob f32 (B,))."""
    w1t, b1c, w2t, b2c, wd, bd = prepared
    B = x.shape[0]
    tb = _choose_tile(B)
    b_pad = _round_up(B, tb)
    num_tiles = b_pad // tb

    # Observations transposed so the batch lives on the lane axis.
    xt = jnp.zeros((OBS_PAD, b_pad), jnp.float32).at[:OBS_DIM, :B].set(x.T)
    u = jax.random.uniform(key, (1, b_pad), jnp.float32)

    grid_spec = pltpu.PrefetchScalarGridSpec(
        num_scalar_prefetch=0,
        grid=(num_tiles,),
        in_specs=[
            pl.BlockSpec((1, tb), lambda i: (0, i)),            # uniforms (batch-tiled)
            pl.BlockSpec((OBS_PAD, tb), lambda i: (0, i)),      # obs (batch-tiled)
            pl.BlockSpec((HIDDEN, OBS_PAD), lambda i: (0, 0)),  # weights: VMEM-resident
            pl.BlockSpec((HIDDEN, 1), lambda i: (0, 0)),
            pl.BlockSpec((HIDDEN, HIDDEN), lambda i: (0, 0)),
            pl.BlockSpec((HIDDEN, 1), lambda i: (0, 0)),
            pl.BlockSpec((8, HIDDEN), lambda i: (0, 0)),
            pl.BlockSpec((1, 1), lambda i: (0, 0)),
        ],
        out_specs=(
            pl.BlockSpec((1, tb), lambda i: (0, i)),
            pl.BlockSpec((1, tb), lambda i: (0, i)),
        ),
    )

    weight_flops = OBS_PAD * HIDDEN + HIDDEN * HIDDEN + 8 * HIDDEN
    weight_bytes = (HIDDEN * OBS_PAD + HIDDEN * HIDDEN + 8 * HIDDEN + 2 * HIDDEN + 1) * 4
    cost = pl.CostEstimate(
        flops=2 * b_pad * weight_flops,
        transcendentals=3 * b_pad,
        bytes_accessed=b_pad * (OBS_PAD + 1 + 1 + 1) * 4 + weight_bytes,
    )

    action, logp = pl.pallas_call(
        actor_sample_kernel,
        out_shape=(jax.ShapeDtypeStruct((1, b_pad), jnp.int32),
                   jax.ShapeDtypeStruct((1, b_pad), jnp.float32)),
        grid_spec=grid_spec,
        compiler_params=pltpu.CompilerParams(
            dimension_semantics=("parallel",)),
        cost_estimate=cost,
    )(u, xt, w1t, b1c, w2t, b2c, wd, bd)

    return action[0, :B], logp[0, :B]


def init_params(key):
    """Deterministic init matching the torch Linear layer shapes.

    torch.nn.Linear(in, out) has weight (out, in), bias (out,); we store weights
    transposed as (in, out) and biases as (out,)."""
    ks = jax.random.split(key, 6)

    def linear(kw, kb, fan_in, fan_out):
        bound = 1.0 / jnp.sqrt(fan_in)
        w = jax.random.uniform(kw, (fan_in, fan_out), jnp.float32, -bound, bound)
        b = jax.random.uniform(kb, (fan_out,), jnp.float32, -bound, bound)
        return w, b

    w1, b1 = linear(ks[0], ks[1], OBS_DIM, HIDDEN)
    w2, b2 = linear(ks[2], ks[3], HIDDEN, HIDDEN)
    w3, b3 = linear(ks[4], ks[5], HIDDEN, N_ACTIONS)
    return (w1, b1, w2, b2, w3, b3)


def reference_log_probs(x, params):
    w1, b1, w2, b2, w3, b3 = params
    h1 = jnp.maximum(x @ w1 + b1, 0.0)
    h2 = jnp.maximum(h1 @ w2 + b2, 0.0)
    logits = h2 @ w3 + b3
    return jax.nn.log_softmax(logits, axis=-1)


if __name__ == "__main__":
    key = jax.random.PRNGKey(0)
    k_param, k_obs1, k_samp1, k_obs2, k_samp2 = jax.random.split(key, 5)

    params = init_params(k_param)
    prepared = prepare_params(params)

    get_action = jax.jit(actor_get_action)

    def check(B, k_obs, k_samp):
        x = jax.random.normal(k_obs, (B, OBS_DIM), dtype=jnp.float32)
        action, log_prob = get_action(x, prepared, k_samp)
        jax.block_until_ready((action, log_prob))

        assert action.shape == (B,) and log_prob.shape == (B,)
        assert bool(jnp.all((action >= 0) & (action < N_ACTIONS)))
        assert bool(jnp.all(jnp.isfinite(log_prob)))
        assert bool(jnp.all(log_prob <= 1e-4))
        ref_lp = reference_log_probs(x, params)
        ref_g = jnp.take_along_axis(ref_lp, action[:, None].astype(jnp.int32), axis=1)[:, 0]
        assert bool(jnp.allclose(log_prob, ref_g, atol=5e-2, rtol=5e-2))

    check(4, k_obs1, k_samp1)     # small-batch (inference-style) path: one 128-wide tile
    check(260, k_obs2, k_samp2)   # multi-tile path: two 256-wide tiles
    print("KERNEL_OK")
</pallas_src>

<mosaic_0001>
module attributes {stable_mosaic.version = 11 : i64} {
  func.func @actor_sample_kernel(%arg0: i32, %arg1: memref<1x128xf32, #tpu.memory_space<vmem>>, %arg2: memref<8x128xf32, #tpu.memory_space<vmem>>, %arg3: memref<64x8xf32, #tpu.memory_space<vmem>>, %arg4: memref<64x1xf32, #tpu.memory_space<vmem>>, %arg5: memref<64x64xf32, #tpu.memory_space<vmem>>, %arg6: memref<64x1xf32, #tpu.memory_space<vmem>>, %arg7: memref<8x64xf32, #tpu.memory_space<vmem>>, %arg8: memref<1x1xf32, #tpu.memory_space<vmem>>, %arg9: memref<1x128xi32, #tpu.memory_space<vmem>>, %arg10: memref<1x128xf32, #tpu.memory_space<vmem>>) attributes {dimension_semantics = [#tpu.dimension_semantics<parallel>], iteration_bounds = array<i64: 1>, scalar_prefetch = 0 : i64, scratch_operands = 0 : i64, tpu.core_type = #tpu.core_type<tc>, window_params = [{transform_indices = @transform_0, window_bounds = array<i64: 1, 128>}, {transform_indices = @transform_1, window_bounds = array<i64: 8, 128>}, {pipeline_mode = #tpu.pipeline_mode<synchronous>, transform_indices = @transform_2, window_bounds = array<i64: 64, 8>}, {pipeline_mode = #tpu.pipeline_mode<synchronous>, transform_indices = @transform_3, window_bounds = array<i64: 64, 1>}, {pipeline_mode = #tpu.pipeline_mode<synchronous>, transform_indices = @transform_4, window_bounds = array<i64: 64, 64>}, {pipeline_mode = #tpu.pipeline_mode<synchronous>, transform_indices = @transform_5, window_bounds = array<i64: 64, 1>}, {pipeline_mode = #tpu.pipeline_mode<synchronous>, transform_indices = @transform_6, window_bounds = array<i64: 8, 64>}, {pipeline_mode = #tpu.pipeline_mode<synchronous>, transform_indices = @transform_7, window_bounds = array<i64: 1, 1>}, {transform_indices = @transform_8, window_bounds = array<i64: 1, 128>}, {transform_indices = @transform_9, window_bounds = array<i64: 1, 128>}]} {
    %c0 = arith.constant 0 : index
    %c0_0 = arith.constant 0 : index
    %0 = vector.load %arg3[%c0, %c0_0] : memref<64x8xf32, #tpu.memory_space<vmem>>, vector<64x8xf32>
    %c0_1 = arith.constant 0 : index
    %c0_2 = arith.constant 0 : index
    %1 = vector.load %arg2[%c0_1, %c0_2] : memref<8x128xf32, #tpu.memory_space<vmem>>, vector<8x128xf32>
    %cst = arith.constant dense<0.000000e+00> : vector<64x128xf32>
    %2 = tpu.matmul %0, %1, %cst {dimension_numbers = #tpu.dot_dimension_numbers<[1], [0], [0], [1], [0, 0, 1, 1], [], []>} : vector<64x8xf32>, vector<8x128xf32>, vector<64x128xf32> -> vector<64x128xf32>
    %c0_3 = arith.constant 0 : index
    %c0_4 = arith.constant 0 : index
    %3 = vector.load %arg4[%c0_3, %c0_4] : memref<64x1xf32, #tpu.memory_space<vmem>>, vector<64x1xf32>
    %4 = vector.broadcast %3 : vector<64x1xf32> to vector<64x128xf32>
    %5 = arith.addf %2, %4 : vector<64x128xf32>
    %cst_5 = arith.constant 0.000000e+00 : f32
    %6 = vector.broadcast %cst_5 : f32 to vector<64x128xf32>
    %7 = arith.maximumf %5, %6 : vector<64x128xf32>
    %c0_6 = arith.constant 0 : index
    %c0_7 = arith.constant 0 : index
    %8 = vector.load %arg5[%c0_6, %c0_7] : memref<64x64xf32, #tpu.memory_space<vmem>>, vector<64x64xf32>
    %cst_8 = arith.constant dense<0.000000e+00> : vector<64x128xf32>
    %9 = tpu.matmul %8, %7, %cst_8 {dimension_numbers = #tpu.dot_dimension_numbers<[1], [0], [0], [1], [0, 0, 1, 1], [], []>} : vector<64x64xf32>, vector<64x128xf32>, vector<64x128xf32> -> vector<64x128xf32>
    %c0_9 = arith.constant 0 : index
    %c0_10 = arith.constant 0 : index
    %10 = vector.load %arg6[%c0_9, %c0_10] : memref<64x1xf32, #tpu.memory_space<vmem>>, vector<64x1xf32>
    %11 = vector.broadcast %10 : vector<64x1xf32> to vector<64x128xf32>
    %12 = arith.addf %9, %11 : vector<64x128xf32>
    %cst_11 = arith.constant 0.000000e+00 : f32
    %13 = vector.broadcast %cst_11 : f32 to vector<64x128xf32>
    %14 = arith.maximumf %12, %13 : vector<64x128xf32>
    %c0_12 = arith.constant 0 : index
    %c0_13 = arith.constant 0 : index
    %15 = vector.load %arg7[%c0_12, %c0_13] : memref<8x64xf32, #tpu.memory_space<vmem>>, vector<8x64xf32>
    %cst_14 = arith.constant dense<0.000000e+00> : vector<8x128xf32>
    %16 = tpu.matmul %15, %14, %cst_14 {dimension_numbers = #tpu.dot_dimension_numbers<[1], [0], [0], [1], [0, 0, 1, 1], [], []>} : vector<8x64xf32>, vector<64x128xf32>, vector<8x128xf32> -> vector<8x128xf32>
    %17 = vector.extract_strided_slice %16 {offsets = [0, 0], sizes = [1, 128], strides = [1, 1]} : vector<8x128xf32> to vector<1x128xf32>
    %c0_15 = arith.constant 0 : index
    %c0_16 = arith.constant 0 : index
    %18 = vector.load %arg8[%c0_15, %c0_16] : memref<1x1xf32, #tpu.memory_space<vmem>>, vector<1x1xf32>
    %19 = vector.broadcast %18 : vector<1x1xf32> to vector<1x128xf32>
    %20 = arith.addf %17, %19 : vector<1x128xf32>
    %21 = math.absf %20 : vector<1x128xf32>
    %cst_17 = arith.constant 0.000000e+00 : f32
    %22 = vector.broadcast %cst_17 : f32 to vector<1x128xf32>
    %23 = arith.subf %22, %21 : vector<1x128xf32>
    %24 = math.exp %23 : vector<1x128xf32>
    %cst_18 = arith.constant 1.000000e+00 : f32
    %25 = vector.broadcast %cst_18 : f32 to vector<1x128xf32>
    %26 = arith.addf %25, %24 : vector<1x128xf32>
    %27 = math.log %26 : vector<1x128xf32>
    %cst_19 = arith.constant 0.000000e+00 : f32
    %28 = vector.broadcast %cst_19 : f32 to vector<1x128xf32>
    %29 = arith.subf %28, %20 : vector<1x128xf32>
    %cst_20 = arith.constant 0.000000e+00 : f32
    %30 = vector.broadcast %cst_20 : f32 to vector<1x128xf32>
    %31 = arith.maximumf %29, %30 : vector<1x128xf32>
    %32 = arith.addf %31, %27 : vector<1x128xf32>
    %cst_21 = arith.constant 0.000000e+00 : f32
    %33 = vector.broadcast %cst_21 : f32 to vector<1x128xf32>
    %34 = arith.subf %33, %32 : vector<1x128xf32>
    %35 = arith.subf %34, %20 : vector<1x128xf32>
    %36 = math.exp %34 : vector<1x128xf32>
    %c0_22 = arith.constant 0 : index
    %c0_23 = arith.constant 0 : index
    %37 = vector.load %arg1[%c0_22, %c0_23] : memref<1x128xf32, #tpu.memory_space<vmem>>, vector<1x128xf32>
    %38 = arith.cmpf olt, %37, %36 : vector<1x128xf32>
    %39 = arith.extui %38 : vector<1x128xi1> to vector<1x128xi32>
    %c0_24 = arith.constant 0 : index
    %c0_25 = arith.constant 0 : index
    %40 = vector.load %arg9[%c0_24, %c0_25] : memref<1x128xi32, #tpu.memory_space<vmem>>, vector<1x128xi32>
    tpu.vector_store %arg9[%c0_24, %c0_25], %39 {strides = array<i32>} : memref<1x128xi32, #tpu.memory_space<vmem>>, vector<1x128xi32>,
    %41 = arith.select %38, %34, %35 : vector<1x128xi1>, vector<1x128xf32>
    %c0_26 = arith.constant 0 : index
    %c0_27 = arith.constant 0 : index
    %42 = vector.load %arg10[%c0_26, %c0_27] : memref<1x128xf32, #tpu.memory_space<vmem>>, vector<1x128xf32>
    tpu.vector_store %arg10[%c0_26, %c0_27], %41 {strides = array<i32>} : memref<1x128xf32, #tpu.memory_space<vmem>>, vector<1x128xf32>,
    return
  }
  func.func @transform_0(%arg0: i32) -> (i32, i32) {
    %c0_i32 = arith.constant 0 : i32
    %c0_i32_0 = arith.constant 0 : i32
    return %c0_i32, %arg0 : i32, i32
  }
  func.func @transform_1(%arg0: i32) -> (i32, i32) {
    %c0_i32 = arith.constant 0 : i32
    %c0_i32_0 = arith.constant 0 : i32
    return %c0_i32, %arg0 : i32, i32
  }
  func.func @transform_2(%arg0: i32) -> (i32, i32) {
    %c0_i32 = arith.constant 0 : i32
    %c0_i32_0 = arith.constant 0 : i32
    %c0_i32_1 = arith.constant 0 : i32
    return %c0_i32, %c0_i32_0 : i32, i32
  }
  func.func @transform_3(%arg0: i32) -> (i32, i32) {
    %c0_i32 = arith.constant 0 : i32
    %c0_i32_0 = arith.constant 0 : i32
    %c0_i32_1 = arith.constant 0 : i32
    return %c0_i32, %c0_i32_0 : i32, i32
  }
  func.func @transform_4(%arg0: i32) -> (i32, i32) {
    %c0_i32 = arith.constant 0 : i32
    %c0_i32_0 = arith.constant 0 : i32
    %c0_i32_1 = arith.constant 0 : i32
    return %c0_i32, %c0_i32_0 : i32, i32
  }
  func.func @transform_5(%arg0: i32) -> (i32, i32) {
    %c0_i32 = arith.constant 0 : i32
    %c0_i32_0 = arith.constant 0 : i32
    %c0_i32_1 = arith.constant 0 : i32
    return %c0_i32, %c0_i32_0 : i32, i32
  }
  func.func @transform_6(%arg0: i32) -> (i32, i32) {
    %c0_i32 = arith.constant 0 : i32
    %c0_i32_0 = arith.constant 0 : i32
    %c0_i32_1 = arith.constant 0 : i32
    return %c0_i32, %c0_i32_0 : i32, i32
  }
  func.func @transform_7(%arg0: i32) -> (i32, i32) {
    %c0_i32 = arith.constant 0 : i32
    %c0_i32_0 = arith.constant 0 : i32
    %c0_i32_1 = arith.constant 0 : i32
    return %c0_i32, %c0_i32_0 : i32, i32
  }
  func.func @transform_8(%arg0: i32) -> (i32, i32) {
    %c0_i32 = arith.constant 0 : i32
    %c0_i32_0 = arith.constant 0 : i32
    return %c0_i32, %arg0 : i32, i32
  }
  func.func @transform_9(%arg0: i32) -> (i32, i32) {
    %c0_i32 = arith.constant 0 : i32
    %c0_i32_0 = arith.constant 0 : i32
    return %c0_i32, %arg0 : i32, i32
  }
}

</mosaic_0001>

<llo_original>
// kernel: actor_get_action.1
$region0: #{actor_get_action.1}
  #allocation0 [shape = 'u32[]', space=smem, size = 0x4, offset = 0x4, fixed_abs, tag = 'smem constant byte address 0x4 - core index']
  #allocation1 [shape = 'u32[72,128]{1,0:T(1,128)}', space=vmem, size = 0x9000, scoped, tag = 'internal scratch']
  #allocation2 [shape = 'f32[1,1]{1,0:T(1,128)S(1)}', space=vmem, size = 0x200, scoped, tag = 'scoped memory for actor_get_action.1']
  %s0 = inlined_call_operand.vmem [shape: f32[1,128], index: 0, kind: input, shape index: {}]
  %s1 = inlined_call_operand.vmem [shape: f32[8,128], index: 1, kind: input, shape index: {}]
  %s2 = inlined_call_operand.vmem [shape: f32[64,8], index: 2, kind: input, shape index: {}]
  %s3 = inlined_call_operand.vmem [shape: f32[64,1], index: 3, kind: input, shape index: {}]
  %s4 = inlined_call_operand.vmem [shape: f32[64,64], index: 4, kind: input, shape index: {}]
  %s5 = inlined_call_operand.vmem [shape: f32[64,1], index: 5, kind: input, shape index: {}]
  %s6 = inlined_call_operand.vmem [shape: f32[8,64], index: 6, kind: input, shape index: {}]
  %s7 = inlined_call_operand.<no memory space> [shape: f32[1,1], index: 7, kind: input, shape index: {}]
  %s8 = inlined_call_operand.vmem [shape: s32[1,128], index: 8, kind: output, shape index: {0}]
  %s9 = inlined_call_operand.vmem [shape: f32[1,128], index: 9, kind: output, shape index: {1}]
  %10 = xla_tuple %s8, %s9
  %s11 = sld [smem:[#allocation0]]
  $region50: #{actor_get_action.1} parent=0
    _
  %s13 = ssub.s32 1, %s11
  %s14 = scalar_select 0, %s13, %s11
  %v15 = vstv %s7
  %16 = vst [vmem:[#allocation2] sm:$0x1] %v15
  // Predicated region
  $region2: #{actor_get_action.1} parent=0 // pred_check
    _
  $region3: #{actor_get_action.1} parent=0 // pred_check_branch
    %18 = sbr.rel (0) target = $region5
  $region4: #{actor_get_action.1} parent=0 // pred_region
    _
  $region5: #{actor_get_action.1} parent=0 // pred_fallthru
    _
  // Predicated region
  $region6: #{actor_get_action.1} parent=0 // pred_check
    _
  $region7: #{actor_get_action.1} parent=0 // pred_check_branch
    %20 = sbr.rel (0) target = $region9
  $region8: #{actor_get_action.1} parent=0 // pred_region
    _
  $region9: #{actor_get_action.1} parent=0 // pred_fallthru
    _
  // Predicated region
  $region10: #{actor_get_action.1} parent=0 // pred_check
    _
  $region11: #{actor_get_action.1} parent=0 // pred_check_branch
    %22 = sbr.rel (0) target = $region13
  $region12: #{actor_get_action.1} parent=0 // pred_region
    _
  $region13: #{actor_get_action.1} parent=0 // pred_fallthru
    _
  // Predicated region
  $region14: #{actor_get_action.1} parent=0 // pred_check
    _
  $region15: #{actor_get_action.1} parent=0 // pred_check_branch
    %24 = sbr.rel (0) target = $region17
  $region16: #{actor_get_action.1} parent=0 // pred_region
    _
  $region17: #{actor_get_action.1} parent=0 // pred_fallthru
    _
  // Predicated region
  $region18: #{actor_get_action.1} parent=0 // pred_check
    _
  $region19: #{actor_get_action.1} parent=0 // pred_check_branch
    %26 = sbr.rel (0) target = $region21
  $region20: #{actor_get_action.1} parent=0 // pred_region
    _
  $region21: #{actor_get_action.1} parent=0 // pred_fallthru
    _
  // Predicated region
  $region22: #{actor_get_action.1} parent=0 // pred_check
    _
  $region23: #{actor_get_action.1} parent=0 // pred_check_branch
    %28 = sbr.rel (0) target = $region25
  $region24: #{actor_get_action.1} parent=0 // pred_region
    _
  $region25: #{actor_get_action.1} parent=0 // pred_fallthru
    _
  // Predicated region
  $region26: #{actor_get_action.1} parent=0 // pred_check
    _
  $region27: #{actor_get_action.1} parent=0 // pred_check_branch
    %30 = sbr.rel (0) target = $region29
  $region28: #{actor_get_action.1} parent=0 // pred_region
    _
  $region29: #{actor_get_action.1} parent=0 // pred_fallthru
    _
  // Predicated region
  $region30: #{actor_get_action.1} parent=0 // pred_check
    _
  $region31: #{actor_get_action.1} parent=0 // pred_check_branch
    %32 = sbr.rel (0) target = $region33
  $region32: #{actor_get_action.1} parent=0 // pred_region
    _
  $region33: #{actor_get_action.1} parent=0 // pred_fallthru
    _
  %v33 = vld [vmem:[%s2] sm:$0xff]
  %v34 = vld [vmem:[%s2 + $0x8] sm:$0xff]
  %v35 = vld [vmem:[%s2 + $0x10] sm:$0xff]
  %v36 = vld [vmem:[%s2 + $0x18] sm:$0xff]
  %v37 = vld [vmem:[%s2 + $0x20] sm:$0xff]
  %v38 = vld [vmem:[%s2 + $0x28] sm:$0xff]
  %v39 = vld [vmem:[%s2 + $0x30] sm:$0xff]
  %v40 = vld [vmem:[%s2 + $0x38] sm:$0xff]
  %v41 = vld [vmem:[%s1] sm:$0xff]
  %v42 = vld [vmem:[%s3] sm:$0xff]
  %v43 = vld [vmem:[%s3 + $0x8] sm:$0xff]
  %v44 = vld [vmem:[%s3 + $0x10] sm:$0xff]
  %v45 = vld [vmem:[%s3 + $0x18] sm:$0xff]
  %v46 = vld [vmem:[%s3 + $0x20] sm:$0xff]
  %v47 = vld [vmem:[%s3 + $0x28] sm:$0xff]
  %v48 = vld [vmem:[%s3 + $0x30] sm:$0xff]
  %v49 = vld [vmem:[%s3 + $0x38] sm:$0xff]
  %51 = vset.pattern.permute.xlu0 0
  %52 = vperm.xlu0 %51, %v42
  %v53 = vpop.permute.xlu0 %52
  %56 = vset.pattern.permute.xlu0 0
  %57 = vperm.xlu0 %56, %v43
  %v58 = vpop.permute.xlu0 %57
  %61 = vset.pattern.permute.xlu0 0
  %62 = vperm.xlu0 %61, %v44
  %v63 = vpop.permute.xlu0 %62
  %66 = vset.pattern.permute.xlu0 0
  %67 = vperm.xlu0 %66, %v45
  %v68 = vpop.permute.xlu0 %67
  %71 = vset.pattern.permute.xlu0 0
  %72 = vperm.xlu0 %71, %v46
  %v73 = vpop.permute.xlu0 %72
  %76 = vset.pattern.permute.xlu0 0
  %77 = vperm.xlu0 %76, %v47
  %v78 = vpop.permute.xlu0 %77
  %81 = vset.pattern.permute.xlu0 0
  %82 = vperm.xlu0 %81, %v48
  %v83 = vpop.permute.xlu0 %82
  %86 = vset.pattern.permute.xlu0 0
  %87 = vperm.xlu0 %86, %v49
  %v88 = vpop.permute.xlu0 %87
  %vm90 = vcmask 64512
  %v92 = vsel %vm90, %v33, 0
  %v95 = vsel %vm90, %v34, 0
  %v98 = vsel %vm90, %v35, 0
  %v101 = vsel %vm90, %v36, 0
  %v104 = vsel %vm90, %v37, 0
  %v107 = vsel %vm90, %v38, 0
  %v110 = vsel %vm90, %v39, 0
  %v113 = vsel %vm90, %v40, 0
  %115 = vmatpush.msra.mxu0 0.0
  %116 = vmatpush.msra.mxu0 0.0
  %117 = vmatpush.msra.mxu0 0.0
  %118 = vmatpush.msra.mxu0 0.0
  %119 = vmatpush.msra.mxu0 0.0
  %120 = vmatpush.msra.mxu0 0.0
  %121 = vmatpush.msra.mxu0 0.0
  %122 = vmatpush.msra.mxu0 0.0
  %123 = vmatpush.msra.mxu0 0.0
  %124 = vmatpush.msra.mxu0 0.0
  %125 = vmatpush.msra.mxu0 0.0
  %126 = vmatpush.msra.mxu0 0.0
  %127 = vmatpush.msra.mxu0 0.0
  %128 = vmatpush.msra.mxu0 0.0
  %129 = vmatpush.msra.mxu0 0.0
  %130 = vmatpush.msra.mxu0 %v41
  %131 = vmatmul.f32.gmra.mxu0 %v92
  %v132 = vpop.f32.mrf.mxu0
  %v133 = vadd.f32 %v53, %v132
  %134 = vmatmul.f32.gmra.mxu0 %v95
  %v135 = vpop.f32.mrf.mxu0
  %v136 = vadd.f32 %v58, %v135
  %137 = vmatmul.f32.gmra.mxu0 %v98
  %v138 = vpop.f32.mrf.mxu0
  %v139 = vadd.f32 %v63, %v138
  %140 = vmatmul.f32.gmra.mxu0 %v101
  %v141 = vpop.f32.mrf.mxu0
  %v142 = vadd.f32 %v68, %v141
  %143 = vmatmul.f32.gmra.mxu0 %v104
  %v144 = vpop.f32.mrf.mxu0
  %v145 = vadd.f32 %v73, %v144
  %146 = vmatmul.f32.gmra.mxu0 %v107
  %v147 = vpop.f32.mrf.mxu0
  %v148 = vadd.f32 %v78, %v147
  %149 = vmatmul.f32.gmra.mxu0 %v110
  %v150 = vpop.f32.mrf.mxu0
  %v151 = vadd.f32 %v83, %v150
  %152 = vmatmul.f32.gmra.mxu0 %v113
  %v153 = vpop.f32.mrf.mxu0
  %v154 = vadd.f32 %v88, %v153
  %155 = vdwg.mxu0
  %v156 = vmax.f32 %v133, 0.0
  %v157 = vmax.f32 %v136, 0.0
  %v158 = vmax.f32 %v139, 0.0
  %v159 = vmax.f32 %v142, 0.0
  %v160 = vmax.f32 %v145, 0.0
  %v161 = vmax.f32 %v148, 0.0
  %v162 = vmax.f32 %v151, 0.0
  %v163 = vmax.f32 %v154, 0.0
  %v164 = vld [vmem:[%s4] sm:$0xff]
  %v165 = vld [vmem:[%s4 + $0x8] sm:$0xff]
  %v166 = vld [vmem:[%s4 + $0x10] sm:$0xff]
  %v167 = vld [vmem:[%s4 + $0x18] sm:$0xff]
  %v168 = vld [vmem:[%s4 + $0x20] sm:$0xff]
  %v169 = vld [vmem:[%s4 + $0x28] sm:$0xff]
  %v170 = vld [vmem:[%s4 + $0x30] sm:$0xff]
  %v171 = vld [vmem:[%s4 + $0x38] sm:$0xff]
  %v172 = vld [vmem:[%s5] sm:$0xff]
  %v173 = vld [vmem:[%s5 + $0x8] sm:$0xff]
  %v174 = vld [vmem:[%s5 + $0x10] sm:$0xff]
  %v175 = vld [vmem:[%s5 + $0x18] sm:$0xff]
  %v176 = vld [vmem:[%s5 + $0x20] sm:$0xff]
  %v177 = vld [vmem:[%s5 + $0x28] sm:$0xff]
  %v178 = vld [vmem:[%s5 + $0x30] sm:$0xff]
  %v179 = vld [vmem:[%s5 + $0x38] sm:$0xff]
  %181 = vset.pattern.permute.xlu0 0
  %182 = vperm.xlu0 %181, %v172
  %v183 = vpop.permute.xlu0 %182
  %186 = vset.pattern.permute.xlu0 0
  %187 = vperm.xlu0 %186, %v173
  %v188 = vpop.permute.xlu0 %187
  %191 = vset.pattern.permute.xlu0 0
  %192 = vperm.xlu0 %191, %v174
  %v193 = vpop.permute.xlu0 %192
  %196 = vset.pattern.permute.xlu0 0
  %197 = vperm.xlu0 %196, %v175
  %v198 = vpop.permute.xlu0 %197
  %201 = vset.pattern.permute.xlu0 0
  %202 = vperm.xlu0 %201, %v176
  %v203 = vpop.permute.xlu0 %202
  %206 = vset.pattern.permute.xlu0 0
  %207 = vperm.xlu0 %206, %v177
  %v208 = vpop.permute.xlu0 %207
  %211 = vset.pattern.permute.xlu0 0
  %212 = vperm.xlu0 %211, %v178
  %v213 = vpop.permute.xlu0 %212
  %216 = vset.pattern.permute.xlu0 0
  %217 = vperm.xlu0 %216, %v179
  %v218 = vpop.permute.xlu0 %217
  %vm220 = vcmask 523264
  %v222 = vsel %vm220, %v164, 0
  %v225 = vsel %vm220, %v165, 0
  %v228 = vsel %vm220, %v166, 0
  %v231 = vsel %vm220, %v167, 0
  %v234 = vsel %vm220, %v168, 0
  %v237 = vsel %vm220, %v169, 0
  %v240 = vsel %vm220, %v170, 0
  %v243 = vsel %vm220, %v171, 0
  %245 = vmatpush.msra.mxu0 0.0
  %246 = vmatpush.msra.mxu0 0.0
  %247 = vmatpush.msra.mxu0 0.0
  %248 = vmatpush.msra.mxu0 0.0
  %249 = vmatpush.msra.mxu0 0.0
  %250 = vmatpush.msra.mxu0 0.0
  %251 = vmatpush.msra.mxu0 0.0
  %252 = vmatpush.msra.mxu0 0.0
  %253 = vmatpush.msra.mxu0 %v163
  %254 = vmatpush.msra.mxu0 %v162
  %255 = vmatpush.msra.mxu0 %v161
  %256 = vmatpush.msra.mxu0 %v160
  %257 = vmatpush.msra.mxu0 %v159
  %258 = vmatpush.msra.mxu0 %v158
  %259 = vmatpush.msra.mxu0 %v157
  %260 = vmatpush.msra.mxu0 %v156
  %261 = vmatmul.f32.gmra.mxu0 %v222
  %v262 = vpop.f32.mrf.mxu0
  %v263 = vadd.f32 %v183, %v262
  %264 = vmatmul.f32.gmra.mxu0 %v225
  %v265 = vpop.f32.mrf.mxu0
  %v266 = vadd.f32 %v188, %v265
  %267 = vmatmul.f32.gmra.mxu0 %v228
  %v268 = vpop.f32.mrf.mxu0
  %v269 = vadd.f32 %v193, %v268
  %270 = vmatmul.f32.gmra.mxu0 %v231
  %v271 = vpop.f32.mrf.mxu0
  %v272 = vadd.f32 %v198, %v271
  %273 = vmatmul.f32.gmra.mxu0 %v234
  %v274 = vpop.f32.mrf.mxu0
  %v275 = vadd.f32 %v203, %v274
  %276 = vmatmul.f32.gmra.mxu0 %v237
  %v277 = vpop.f32.mrf.mxu0
  %v278 = vadd.f32 %v208, %v277
  %279 = vmatmul.f32.gmra.mxu0 %v240
  %v280 = vpop.f32.mrf.mxu0
  %v281 = vadd.f32 %v213, %v280
  %282 = vmatmul.f32.gmra.mxu0 %v243
  %v283 = vpop.f32.mrf.mxu0
  %v284 = vadd.f32 %v218, %v283
  %285 = vdwg.mxu0
  %v286 = vmax.f32 %v263, 0.0
  %v287 = vmax.f32 %v266, 0.0
  %v288 = vmax.f32 %v269, 0.0
  %v289 = vmax.f32 %v272, 0.0
  %v290 = vmax.f32 %v275, 0.0
  %v291 = vmax.f32 %v278, 0.0
  %v292 = vmax.f32 %v281, 0.0
  %v293 = vmax.f32 %v284, 0.0
  %v294 = vld [vmem:[%s6] sm:$0xff]
  %v296 = vsel %vm220, %v294, 0
  %298 = vmatpush.msra.mxu0 0.0
  %299 = vmatpush.msra.mxu0 0.0
  %300 = vmatpush.msra.mxu0 0.0
  %301 = vmatpush.msra.mxu0 0.0
  %302 = vmatpush.msra.mxu0 0.0
  %303 = vmatpush.msra.mxu0 0.0
  %304 = vmatpush.msra.mxu0 0.0
  %305 = vmatpush.msra.mxu0 0.0
  %306 = vmatpush.msra.mxu0 %v293
  %307 = vmatpush.msra.mxu0 %v292
  %308 = vmatpush.msra.mxu0 %v291
  %309 = vmatpush.msra.mxu0 %v290
  %310 = vmatpush.msra.mxu0 %v289
  %311 = vmatpush.msra.mxu0 %v288
  %312 = vmatpush.msra.mxu0 %v287
  %313 = vmatpush.msra.mxu0 %v286
  %314 = vmatmul.f32.gmra.mxu0 %v296
  %v315 = vpop.f32.mrf.mxu0
  %v316 = vadd.f32 0.0, %v315
  %317 = vdwg.mxu0
  %v318 = vld [vmem:[#allocation2] sm:$0x1]
  %320 = vset.pattern.permute.xlu0 0
  %321 = vperm.xlu0 %320, %v318
  %v322 = vpop.permute.xlu0 %321
  %v324 = vperm.slane %v322, 0
  %v325 = vadd.f32 %v316, %v324
  %v326 = vand.u32 2147483647, %v325
  %v327 = vsub.f32 0.0, %v326
  %v328 = vmul.f32 %v327, 1.442695
  %v329 = vpow.pop %v328
  %v330 = vadd.f32 %v329, 1.0
  %v331 = vlog2.pop %v330
  %v332 = vmul.f32 %v331, 0.6931472
  %v333 = vsub.f32 0.0, %v325
  %v334 = vmax.f32 %v333, 0.0
  %v335 = vadd.f32 %v334, %v332
  %v336 = vsub.f32 0.0, %v335
  %v337 = vsub.f32 %v336, %v325
  %v338 = vmul.f32 %v336, 1.442695
  %v339 = vpow.pop %v338
  %v340 = vld [vmem:[%s0] sm:$0x1]
  %vm341 = vcmp.lt.f32.partialorder %v340, %v339
  %v342 = vsel %vm341, 1, 0
  %343 = vst [vmem:[%s8] sm:$0x1] %v342
  %v344 = vsel %vm341, %v336, %v337
  %345 = vst [vmem:[%s9] sm:$0x1] %v344
  // Predicated region
  $region34: #{actor_get_action.1} parent=0 // pred_check
    _
  $region35: #{actor_get_action.1} parent=0 // pred_check_branch
    %347 = sbr.rel (0) target = $region37
  $region36: #{actor_get_action.1} parent=0 // pred_region
    _
  $region37: #{actor_get_action.1} parent=0 // pred_fallthru
    _
  // Predicated region
  $region38: #{actor_get_action.1} parent=0 // pred_check
    _
  $region39: #{actor_get_action.1} parent=0 // pred_check_branch
    %349 = sbr.rel (0) target = $region41
  $region40: #{actor_get_action.1} parent=0 // pred_region
    _
  $region41: #{actor_get_action.1} parent=0 // pred_fallthru
    _
  // Predicated region
  $region42: #{actor_get_action.1} parent=0 // pred_check
    _
  $region43: #{actor_get_action.1} parent=0 // pred_check_branch
    %351 = sbr.rel (0) target = $region45
  $region44: #{actor_get_action.1} parent=0 // pred_region
    _
  $region45: #{actor_get_action.1} parent=0 // pred_fallthru
    _
  // Predicated region
  $region46: #{actor_get_action.1} parent=0 // pred_check
    _
  $region47: #{actor_get_action.1} parent=0 // pred_check_branch
    %353 = sbr.rel (0) target = $region49
  $region48: #{actor_get_action.1} parent=0 // pred_region
    _
  $region49: #{actor_get_action.1} parent=0 // pred_fallthru
    _

</llo_original>
